<compile_context>
chip_gen: v7x
topology: tpu7x:2x2x1
jax: 0.10.0
libtpu: 0.0.40
codegen_flags: <defaults>
</compile_context>

<pallas_src>
import jax
import jax.numpy as jnp
from jax.experimental import pallas as pl
from jax.experimental.pallas import tpu as pltpu


def _fit_tile(dim, target):
    """Full dim if small enough (always legal), else a multiple of 8 <= target."""
    if dim <= target:
        return dim
    return max(8, (target // 8) * 8)


def _vmem_cost(t_t, t_u, a, out_bytes):
    # Double-buffered output block + double-buffered f32 input blocks.
    return 2 * t_t * t_u * a * out_bytes + 2 * (t_t + t_u) * a * 4


def _choose_tiles(T, U, A, out_bytes, budget_bytes):
    t_t = _fit_tile(T, 128)
    t_u = _fit_tile(U, 128)
    # Shrink tT first: the HBM write of an output block is tT strided runs of
    # tU*A contiguous bytes, so shrinking tT keeps the store runs long.
    while _vmem_cost(t_t, t_u, A, out_bytes) > budget_bytes and t_t > 8:
        t_t = max(8, (t_t // 2) // 8 * 8)
    while _vmem_cost(t_t, t_u, A, out_bytes) > budget_bytes and t_u > 8:
        t_u = max(8, (t_u // 2) // 8 * 8)
    return t_t, t_u


def joint_add_act_kernel(tw_ref, pwb_ref, out_ref):
    """out[0, t, u, :] = LeakyReLU_0.1(tw[0, t, :] + pwb[0, u, :]).

    tw_ref:  [1, tT, A] f32  (trans @ W^T, precomputed)
    pwb_ref: [1, tU, A] f32  (preds @ W^T + b, precomputed)
    out_ref: [1, tT, tU, A]
    """
    t_tile = tw_ref.shape[1]

    # One [tU, A] slab per t: never materializes the [tT, tU, A] intermediate.
    @pl.loop(0, t_tile)
    def _(t):
        row = tw_ref[0, pl.ds(t, 1), :]                # [1, A]
        slab = row + pwb_ref[0]                        # [tU, A] (sublane bcast)
        act = jnp.maximum(slab, 0.1 * slab)            # LeakyReLU(0.1)
        out_ref[0, pl.ds(t, 1)] = act[None].astype(out_ref.dtype)


def joint_net_forward(trans, preds, weight, bias, *, out_dtype=None):
    """trans: [B,T,H], preds: [B,U,H], weight: [A,H] (nn.Linear layout),
    bias: [A]  ->  [B,T,U,A]."""
    B, T, H = trans.shape
    Bp, U, Hp = preds.shape
    assert (B, H) == (Bp, Hp)
    A = weight.shape[0]
    out_dtype = trans.dtype if out_dtype is None else jnp.dtype(out_dtype)

    # Projections done once by XLA (f32 for parity with the f32 PyTorch module).
    w32 = weight.astype(jnp.float32)
    tw = jnp.einsum("bth,ah->bta", trans.astype(jnp.float32), w32)
    pwb = (jnp.einsum("buh,ah->bua", preds.astype(jnp.float32), w32)
           + bias.astype(jnp.float32))

    out_bytes = jnp.dtype(out_dtype).itemsize
    try:
        vmem_cap = int(pltpu.get_tpu_info().vmem_capacity_bytes)
    except Exception:  # pragma: no cover - conservative fallback
        vmem_cap = 64 << 20            # v7x per-TC VMEM, smallest of the fleet
    # <= 1/3 of physical VMEM, capped at 24 MiB so the tiling also fits v7x.
    budget = max(4 << 20, min(vmem_cap // 3, 24 << 20))
    t_t, t_u = _choose_tiles(T, U, A, out_bytes, budget)
    cost = _vmem_cost(t_t, t_u, A, out_bytes)
    vmem_limit = int(min(vmem_cap, max(cost + (4 << 20), 16 << 20)))

    grid = (B, pl.cdiv(T, t_t), pl.cdiv(U, t_u))

    return pl.pallas_call(
        joint_add_act_kernel,
        out_shape=jax.ShapeDtypeStruct((B, T, U, A), out_dtype),
        grid=grid,
        in_specs=[
            pl.BlockSpec((1, t_t, A), lambda b, i, j: (b, i, 0)),
            pl.BlockSpec((1, t_u, A), lambda b, i, j: (b, j, 0)),
        ],
        # Last dim is the true alphabet (full dim): no padding, no wrapper slice.
        out_specs=pl.BlockSpec((1, t_t, t_u, A), lambda b, i, j: (b, i, j, 0)),
        compiler_params=pltpu.CompilerParams(
            dimension_semantics=("parallel", "parallel", "parallel"),
            vmem_limit_bytes=vmem_limit),
    )(tw, pwb)


def joint_net_reference(trans, preds, weight, bias):
    joint = trans[:, :, None, :] + preds[:, None, :, :]            # [B,T,U,H]
    logits = jnp.einsum("btuh,ah->btua", joint, weight) + bias     # [B,T,U,A]
    return jnp.where(logits >= 0, logits, 0.1 * logits)


if __name__ == "__main__":
    def run_case(B, T, U, H, A, key):
        k1, k2, k3, k4 = jax.random.split(key, 4)
        trans = jax.random.normal(k1, (B, T, H), dtype=jnp.float32)
        preds = jax.random.normal(k2, (B, U, H), dtype=jnp.float32)
        bound = 1.0 / (H ** 0.5)
        weight = jax.random.uniform(k3, (A, H), jnp.float32, -bound, bound)
        bias = jax.random.uniform(k4, (A,), jnp.float32, -bound, bound)

        out = jax.block_until_ready(joint_net_forward(trans, preds, weight, bias))
        ref = joint_net_reference(trans, preds, weight, bias)
        assert out.shape == (B, T, U, A)
        assert jnp.allclose(out, ref, atol=1e-5, rtol=1e-5)

    # Small shapes consistent with the module's forward (U == U+1 convention).
    run_case(B=2, T=8, U=9, H=32, A=8, key=jax.random.PRNGKey(0))
    # Non-divisible T (> tile) exercises the cdiv grid / partial edge blocks.
    run_case(B=1, T=130, U=9, H=16, A=8, key=jax.random.PRNGKey(1))

    print("KERNEL_OK")
</pallas_src>

<mosaic_0001>
module attributes {stable_mosaic.version = 11 : i64} {
  func.func @joint_add_act_kernel(%arg0: i32, %arg1: i32, %arg2: i32, %arg3: memref<1x8x8xf32, #tpu.memory_space<vmem>>, %arg4: memref<1x9x8xf32, #tpu.memory_space<vmem>>, %arg5: memref<1x8x9x8xf32, #tpu.memory_space<vmem>>) attributes {dimension_semantics = [#tpu.dimension_semantics<parallel>, #tpu.dimension_semantics<parallel>, #tpu.dimension_semantics<parallel>], iteration_bounds = array<i64: 2, 1, 1>, scalar_prefetch = 0 : i64, scratch_operands = 0 : i64, tpu.core_type = #tpu.core_type<tc>, window_params = [{transform_indices = @transform_0, window_bounds = array<i64: 1, 8, 8>}, {transform_indices = @transform_1, window_bounds = array<i64: 1, 9, 8>}, {transform_indices = @transform_2, window_bounds = array<i64: 1, 8, 9, 8>}]} {
    %c0_i32 = arith.constant 0 : i32
    %c8_i32 = arith.constant 8 : i32
    %0 = arith.addi %c0_i32, %c8_i32 : i32
    %c1_i32 = arith.constant 1 : i32
    scf.for %arg6 = %c0_i32 to %0 step %c1_i32  : i32 {
      %c1_i32_1 = arith.constant 1 : i32
      %1 = arith.muli %arg6, %c1_i32_1 : i32
      %c0_i32_2 = arith.constant 0 : i32
      %2 = arith.addi %c0_i32_2, %1 : i32
      %c0 = arith.constant 0 : index
      %3 = arith.index_cast %2 : i32 to index
      %c0_3 = arith.constant 0 : index
      %4 = vector.load %arg3[%c0, %3, %c0_3] : memref<1x8x8xf32, #tpu.memory_space<vmem>>, vector<1x1x8xf32>
      %5 = vector.shape_cast %4 : vector<1x1x8xf32> to vector<1x8xf32>
      %c0_4 = arith.constant 0 : index
      %c0_5 = arith.constant 0 : index
      %c0_6 = arith.constant 0 : index
      %6 = vector.load %arg4[%c0_4, %c0_5, %c0_6] : memref<1x9x8xf32, #tpu.memory_space<vmem>>, vector<1x9x8xf32>
      %7 = vector.shape_cast %6 : vector<1x9x8xf32> to vector<9x8xf32>
      %8 = vector.broadcast %5 : vector<1x8xf32> to vector<9x8xf32>
      %9 = arith.addf %8, %7 : vector<9x8xf32>
      %cst = arith.constant 1.000000e-01 : f32
      %10 = vector.broadcast %cst : f32 to vector<9x8xf32>
      %11 = arith.mulf %10, %9 : vector<9x8xf32>
      %12 = arith.maximumf %9, %11 : vector<9x8xf32>
      %13 = vector.shape_cast %12 : vector<9x8xf32> to vector<1x9x8xf32>
      %c0_7 = arith.constant 0 : index
      %14 = arith.index_cast %2 : i32 to index
      %c0_8 = arith.constant 0 : index
      %c0_9 = arith.constant 0 : index
      %15 = vector.load %arg5[%c0_7, %14, %c0_8, %c0_9] : memref<1x8x9x8xf32, #tpu.memory_space<vmem>>, vector<1x1x9x8xf32>
      %16 = vector.shape_cast %15 : vector<1x1x9x8xf32> to vector<1x9x8xf32>
      %17 = vector.shape_cast %13 : vector<1x9x8xf32> to vector<1x1x9x8xf32>
      tpu.vector_store %arg5[%c0_7, %14, %c0_8, %c0_9], %17 {strides = array<i32>} : memref<1x8x9x8xf32, #tpu.memory_space<vmem>>, vector<1x1x9x8xf32>,
    }
    %c8_i32_0 = arith.constant 8 : i32
    return
  }
  func.func @transform_0(%arg0: i32, %arg1: i32, %arg2: i32) -> (i32, i32, i32) {
    %c0_i32 = arith.constant 0 : i32
    %c0_i32_0 = arith.constant 0 : i32
    return %arg0, %arg1, %c0_i32 : i32, i32, i32
  }
  func.func @transform_1(%arg0: i32, %arg1: i32, %arg2: i32) -> (i32, i32, i32) {
    %c0_i32 = arith.constant 0 : i32
    %c0_i32_0 = arith.constant 0 : i32
    return %arg0, %arg2, %c0_i32 : i32, i32, i32
  }
  func.func @transform_2(%arg0: i32, %arg1: i32, %arg2: i32) -> (i32, i32, i32, i32) {
    %c0_i32 = arith.constant 0 : i32
    %c0_i32_0 = arith.constant 0 : i32
    return %arg0, %arg1, %arg2, %c0_i32 : i32, i32, i32, i32
  }
}

</mosaic_0001>

<llo_original>
// kernel: tpu_custom_call.1
$region0: #{tpu_custom_call.1}
  #allocation0 [shape = 'u32[]', space=smem, size = 0x4, offset = 0x4, fixed_abs, tag = 'smem constant byte address 0x4 - core index']
  #allocation1 [shape = 'u32[144,128]{1,0:T(1,128)}', space=vmem, size = 0x12000, scoped, tag = 'internal scratch']
  %s0 = inlined_call_operand.vmem [shape: f32[2,8,8], index: 0, kind: input, shape index: {}]
  %s1 = inlined_call_operand.vmem [shape: f32[2,9,8], index: 1, kind: input, shape index: {}]
  %s2 = inlined_call_operand.vmem [shape: f32[2,8,9,8], index: 2, kind: output, shape index: {}]
  %s3 = sld [smem:[#allocation0]]
  $region48: #{tpu_custom_call.1} parent=0
    _
  %s5 = ssub.s32 1, %s3
  %s6 = scalar_select 0, %s5, %s3
  loop: start=0, step=1, limit=4
  $region2: #{tpu_custom_call.1} parent=0 // loop_pre_header
    _
  $region3: #{tpu_custom_call.1} parent=0 // loop_header
    %s8 = sphi 0, %s12
    %p9 = scmp.ge.s32.totalorder %s8, 4
    %s15 = sphi 0, %s34
    %s16 = sphi 0, %s30
    %s17 = sphi 0, %s26
    %s18 = sphi 0, %s15
    %s19 = sphi 0, %s16
    %s20 = sphi 0, %s17
    %s21 = sphi 0, %s18
    %s22 = sphi 0, %s19
    %s23 = sphi 0, %s20
    %s39 = sphi 0, %s41
    %s42 = sphi 0, %s39
    %s43 = sphi 0, %s42
    %s59 = sphi 0, %s43
    %s67 = sphi 0, %s69
    %s70 = sphi 0, %s67
    %s71 = sphi 0, %s70
    %s87 = sphi 0, %s71
    %s97 = sphi 0, %s99
    %s100 = sphi 0, %s97
    %s101 = sphi 0, %s100
    %s117 = sphi 0, %s101
  $region4: #{tpu_custom_call.1} parent=0 // loop_header_branch
    %11 = sbr.rel (%p9) target = $region8
  $region5: #{tpu_custom_call.1} parent=0 // loop_body
    %s13 = ssub.s32 %s8, 1
    %s14 = ssub.s32 %s8, 2
    %s24 = sadd.s32 1, %s17
    %p25 = scmp.ge.s32.totalorder %s24, 1
    %s26 = scalar_select %p25, 0, %s24
    %s27 = sadd.s32 1, %s16
    %s28 = scalar_select %p25, %s27, %s16
    %p29 = scmp.ge.s32.totalorder %s28, 1
    %s30 = scalar_select %p29, 0, %s28
    %s31 = sadd.s32 1, %s15
    %s32 = scalar_select %p29, %s31, %s15
    %p33 = scmp.ge.s32.totalorder %s32, 2
    %s34 = scalar_select %p33, 0, %s32
    %s35 = ssub.s32 %s15, %s34
    %s36 = ssub.s32 %s16, %s30
    %s37 = sor.u32 %s35, %s36
    %p38 = scmp.eq.s32.totalorder %s37, 0
    %s40 = sadd.s32 %s39, 1
    %s41 = scalar_select %p38, %s39, %s40
    %p44 = pneg %p38
    %p45 = scmp.eq.s32.totalorder %s8, 1
    %p46 = por %p44, %p45
    %p47 = scmp.ne.s32.totalorder %s39, %s42
    %p48 = scmp.eq.s32.totalorder %s8, 0
    %p49 = por %p47, %p48
    %p50 = scmp.ne.s32.totalorder %s39, %s42
    %p51 = scmp.eq.s32.totalorder %s13, 1
    %p52 = por %p50, %p51
    %p53 = scmp.ne.s32.totalorder %s42, %s43
    %p54 = scmp.eq.s32.totalorder %s13, 0
    %p55 = por %p53, %p54
    %p56 = scmp.ne.s32.totalorder %s42, %s43
    %p57 = scmp.eq.s32.totalorder %s14, 1
    %p58 = por %p56, %p57
    %p60 = scmp.ne.s32.totalorder %s43, %s59
    %p61 = scmp.eq.s32.totalorder %s14, 0
    %p62 = por %p60, %p61
    %s63 = ssub.s32 %s15, %s34
    %s64 = ssub.s32 %s17, %s26
    %s65 = sor.u32 %s63, %s64
    %p66 = scmp.eq.s32.totalorder %s65, 0
    %s68 = sadd.s32 %s67, 1
    %s69 = scalar_select %p66, %s67, %s68
    %p72 = pneg %p66
    %p73 = scmp.eq.s32.totalorder %s8, 1
    %p74 = por %p72, %p73
    %p75 = scmp.ne.s32.totalorder %s67, %s70
    %p76 = scmp.eq.s32.totalorder %s8, 0
    %p77 = por %p75, %p76
    %p78 = scmp.ne.s32.totalorder %s67, %s70
    %p79 = scmp.eq.s32.totalorder %s13, 1
    %p80 = por %p78, %p79
    %p81 = scmp.ne.s32.totalorder %s70, %s71
    %p82 = scmp.eq.s32.totalorder %s13, 0
    %p83 = por %p81, %p82
    %p84 = scmp.ne.s32.totalorder %s70, %s71
    %p85 = scmp.eq.s32.totalorder %s14, 1
    %p86 = por %p84, %p85
    %p88 = scmp.ne.s32.totalorder %s71, %s87
    %p89 = scmp.eq.s32.totalorder %s14, 0
    %p90 = por %p88, %p89
    %s91 = ssub.s32 %s15, %s34
    %s92 = ssub.s32 %s16, %s30
    %s93 = sor.u32 %s91, %s92
    %s94 = ssub.s32 %s17, %s26
    %s95 = sor.u32 %s93, %s94
    %p96 = scmp.eq.s32.totalorder %s95, 0
    %s98 = sadd.s32 %s97, 1
    %s99 = scalar_select %p96, %s97, %s98
    %p102 = pneg %p96
    %p103 = scmp.eq.s32.totalorder %s8, 1
    %p104 = por %p102, %p103
    %p105 = scmp.ne.s32.totalorder %s97, %s100
    %p106 = scmp.eq.s32.totalorder %s8, 0
    %p107 = por %p105, %p106
    %p108 = scmp.ne.s32.totalorder %s97, %s100
    %p109 = scmp.eq.s32.totalorder %s13, 1
    %p110 = por %p108, %p109
    %p111 = scmp.ne.s32.totalorder %s100, %s101
    %p112 = scmp.eq.s32.totalorder %s13, 0
    %p113 = por %p111, %p112
    %p114 = scmp.ne.s32.totalorder %s100, %s101
    %p115 = scmp.eq.s32.totalorder %s14, 1
    %p116 = por %p114, %p115
    %p118 = scmp.ne.s32.totalorder %s101, %s117
    %p119 = scmp.eq.s32.totalorder %s14, 0
    %p120 = por %p118, %p119
    %p121 = scmp.le.s32.totalorder 1, %s8
    %p122 = scmp.lt.s32.totalorder %s8, 3
    %p123 = pnand %p121, %p122
    %p124 = pneg %p123
    // Predicated region
    $region9: #{tpu_custom_call.1} parent=5 // pred_check
      _
    $region10: #{tpu_custom_call.1} parent=5 // pred_check_branch
      %126 = sbr.rel (%p123) target = $region12
    $region11: #{tpu_custom_call.1} parent=5 // pred_region
      %s127 = ssub.s32 %s8, 1
    $region12: #{tpu_custom_call.1} parent=5 // pred_fallthru
      _
    %p128 = scmp.lt.s32.totalorder %s8, 2
    // Predicated region
    $region13: #{tpu_custom_call.1} parent=5 // pred_check
      %p129 = pneg %p128
    $region14: #{tpu_custom_call.1} parent=5 // pred_check_branch
      %131 = sbr.rel (%p129) target = $region16
    $region15: #{tpu_custom_call.1} parent=5 // pred_region
      // Predicated region
      $region17: #{tpu_custom_call.1} parent=15 // pred_check
        %p132 = pneg %p49
      $region18: #{tpu_custom_call.1} parent=15 // pred_check_branch
        %134 = sbr.rel (%p132) target = $region20
      $region19: #{tpu_custom_call.1} parent=15 // pred_region
        %p135 = scmp.lt.s32.totalorder %s15, 1
        %s136 = scalar_select %p135, %s15, 1
        %p137 = scmp.lt.s32.totalorder %s16, 0
        %s138 = scalar_select %p137, %s16, 0
        %s139 = sadd.s32 %s138, %s136
        %s140 = smul.addr %s139, 8
        %s141 = scalar_lea.vmem %s0, %s140
      $region20: #{tpu_custom_call.1} parent=15 // pred_fallthru
        _
      // Predicated region
      $region21: #{tpu_custom_call.1} parent=15 // pred_check
        %p142 = pneg %p77
      $region22: #{tpu_custom_call.1} parent=15 // pred_check_branch
        %144 = sbr.rel (%p142) target = $region24
      $region23: #{tpu_custom_call.1} parent=15 // pred_region
        %s145 = smul.u32 2, %s17
        %p146 = scmp.lt.s32.totalorder %s15, 1
        %s147 = scalar_select %p146, %s15, 1
        %p148 = scmp.lt.s32.totalorder %s145, 1
        %s149 = scalar_select %p148, %s145, 1
        %s150 = smul.addr %s147, 2
        %s151 = sadd.s32 %s149, %s150
        %s152 = smul.addr %s151, 8
        %s153 = scalar_lea.vmem %s1, %s152
        %s154 = smul.u32 2, %s17
      $region24: #{tpu_custom_call.1} parent=15 // pred_fallthru
        _
    $region16: #{tpu_custom_call.1} parent=5 // pred_fallthru
      _
    %p155 = scmp.le.s32.totalorder 1, %s8
    %p156 = scmp.lt.s32.totalorder %s8, 3
    %p157 = pnand %p155, %p156
    %p158 = pneg %p157
    // Predicated region
    $region25: #{tpu_custom_call.1} parent=5 // pred_check
      _
    $region26: #{tpu_custom_call.1} parent=5 // pred_check_branch
      %160 = sbr.rel (%p157) target = $region28
    $region27: #{tpu_custom_call.1} parent=5 // pred_region
      %s161 = ssub.s32 %s8, 1
      %p162 = scmp.lt.s32.totalorder %s18, 1
      %s163 = scalar_select %p162, %s18, 1
      %p164 = scmp.lt.s32.totalorder %s19, 0
      %s165 = scalar_select %p164, %s19, 0
      %s166 = sadd.s32 %s165, %s163
      %s167 = smul.addr %s166, 8
      %s168 = scalar_lea.vmem %s0, %s167
      %p169 = pneg %p55
      %p170 = pneg %p52
      %s171 = smul.u32 2, %s20
      %p172 = scmp.lt.s32.totalorder %s18, 1
      %s173 = scalar_select %p172, %s18, 1
      %p174 = scmp.lt.s32.totalorder %s171, 1
      %s175 = scalar_select %p174, %s171, 1
      %s176 = smul.addr %s173, 2
      %s177 = sadd.s32 %s175, %s176
      %s178 = smul.addr %s177, 8
      %s179 = scalar_lea.vmem %s1, %s178
      %p180 = pneg %p83
      %p181 = pneg %p80
      %p182 = pneg %p113
      %p183 = pneg %p110
      %s184 = smul.u32 8, %s19
      %s185 = smul.u32 2, %s20
      %p186 = scmp.lt.s32.totalorder %s18, 1
      %s187 = scalar_select %p186, %s18, 1
      %p188 = scmp.lt.s32.totalorder %s184, 7
      %s189 = scalar_select %p188, %s184, 7
      %p190 = scmp.lt.s32.totalorder %s185, 1
      %s191 = scalar_select %p190, %s185, 1
      %s192 = smul.addr %s189, 2
      %s193 = sadd.s32 %s191, %s192
      %s194 = smul.addr %s187, 16
      %s195 = sadd.s32 %s193, %s194
      %s196 = smul.addr %s195, 8
      %s197 = scalar_lea.vmem %s2, %s196
      %p198 = scmp.lt.s32.totalorder %s18, 1
      %s199 = scalar_select %p198, %s18, 1
      %p200 = scmp.lt.s32.totalorder %s19, 0
      %s201 = scalar_select %p200, %s19, 0
      %s202 = sadd.s32 %s201, %s199
      %s203 = smul.addr %s202, 8
      %s204 = scalar_lea.vmem %s0, %s203
      %s205 = smul.u32 2, %s20
      %p206 = scmp.lt.s32.totalorder %s18, 1
      %s207 = scalar_select %p206, %s18, 1
      %p208 = scmp.lt.s32.totalorder %s205, 1
      %s209 = scalar_select %p208, %s205, 1
      %s210 = smul.addr %s207, 2
      %s211 = sadd.s32 %s209, %s210
      %s212 = smul.addr %s211, 8
      %s213 = scalar_lea.vmem %s1, %s212
      %s214 = smul.u32 2, %s20
      %s215 = smul.u32 8, %s19
      %s216 = smul.u32 2, %s20
      %p217 = scmp.lt.s32.totalorder %s18, 1
      %s218 = scalar_select %p217, %s18, 1
      %p219 = scmp.lt.s32.totalorder %s215, 7
      %s220 = scalar_select %p219, %s215, 7
      %p221 = scmp.lt.s32.totalorder %s216, 1
      %s222 = scalar_select %p221, %s216, 1
      %s223 = smul.addr %s220, 2
      %s224 = sadd.s32 %s222, %s223
      %s225 = smul.addr %s218, 16
      %s226 = sadd.s32 %s224, %s225
      %s227 = smul.addr %s226, 8
      %s228 = scalar_lea.vmem %s2, %s227
      %s229 = smul.u32 8, %s19
      %s230 = smul.u32 2, %s20
      loop: start=0, step=1, limit=8
      $region29: #{tpu_custom_call.1} parent=27 // loop_pre_header
        _
      $region30: #{tpu_custom_call.1} parent=27 // loop_header
        %s232 = sphi 0, %s236
        %p233 = scmp.ge.s32.totalorder %s232, 8
      $region31: #{tpu_custom_call.1} parent=27 // loop_header_branch
        %235 = sbr.rel (%p233) target = $region35
      $region32: #{tpu_custom_call.1} parent=27 // loop_body
        %s237 = scalar_lea.vmem %s204, %s232
        %v238 = vld [vmem:[%s237] sm:$0x1]
        %v239 = vld [vmem:[%s213] sm:$0xff]
        %v240 = vld [vmem:[%s213 + $0x8] sm:$0x1]
        %v241 = vlaneseq
        %v242 = vshrl.u32 %v241, 7
        %v243 = vsub.s32 0, %v242
        %v244 = vrot.slane %v238, %v243
        %v245 = vadd.f32 %v244, %v239
        %v246 = vadd.f32 %v244, %v240
        %v247 = vmul.f32 %v245, 0.1
        %v248 = vmul.f32 %v246, 0.1
        %v249 = vmax.f32 %v245, %v247
        %v250 = vmax.f32 %v246, %v248
        %s251 = smul.u32 %s232, 16
        %s252 = scalar_lea.vmem %s228, %s251
        %vm253 = vcmask 64512
        %254 = vst.msk [vmem:[%s252] sm:$0xff] %vm253, %v249
        %vm255 = vcmask 57344
        %256 = vst.msk [vmem:[%s252 + $0x8] sm:$0x1] %vm255, %v250
      $region33: #{tpu_custom_call.1} parent=27 // loop_footer
        %s236 = sadd.s32 1, %s232
      $region34: #{tpu_custom_call.1} parent=27 // loop_footer_branch
        %231 = sbr.rel target = $region30
      $region35: #{tpu_custom_call.1} parent=27 // loop_exit
        _
      %s257 = smul.u32 8, %s19
      %s258 = smul.u32 2, %s20
      %p259 = scmp.lt.s32.totalorder %s18, 1
      %s260 = scalar_select %p259, %s18, 1
      %p261 = scmp.lt.s32.totalorder %s257, 7
      %s262 = scalar_select %p261, %s257, 7
      %p263 = scmp.lt.s32.totalorder %s258, 1
      %s264 = scalar_select %p263, %s258, 1
      %s265 = smul.addr %s262, 2
      %s266 = sadd.s32 %s264, %s265
      %s267 = smul.addr %s260, 16
      %s268 = sadd.s32 %s266, %s267
      %s269 = smul.addr %s268, 8
      %s270 = scalar_lea.vmem %s2, %s269
      // Predicated region
      $region36: #{tpu_custom_call.1} parent=27 // pred_check
        %p271 = pneg %p110
      $region37: #{tpu_custom_call.1} parent=27 // pred_check_branch
        %273 = sbr.rel (%p271) target = $region39
      $region38: #{tpu_custom_call.1} parent=27 // pred_region
        %s274 = smul.u32 8, %s19
        %s275 = smul.u32 2, %s20
      $region39: #{tpu_custom_call.1} parent=27 // pred_fallthru
        _
    $region28: #{tpu_custom_call.1} parent=5 // pred_fallthru
      _
    %p276 = scmp.le.s32.totalorder 2, %s8
    // Predicated region
    $region40: #{tpu_custom_call.1} parent=5 // pred_check
      %p277 = pneg %p276
    $region41: #{tpu_custom_call.1} parent=5 // pred_check_branch
      %279 = sbr.rel (%p277) target = $region43
    $region42: #{tpu_custom_call.1} parent=5 // pred_region
      %s280 = ssub.s32 %s8, 2
      // Predicated region
      $region44: #{tpu_custom_call.1} parent=42 // pred_check
        %p281 = pneg %p116
      $region45: #{tpu_custom_call.1} parent=42 // pred_check_branch
        %283 = sbr.rel (%p281) target = $region47
      $region46: #{tpu_custom_call.1} parent=42 // pred_region
        %s284 = smul.u32 8, %s22
        %s285 = smul.u32 2, %s23
        %p286 = scmp.lt.s32.totalorder %s21, 1
        %s287 = scalar_select %p286, %s21, 1
        %p288 = scmp.lt.s32.totalorder %s284, 7
        %s289 = scalar_select %p288, %s284, 7
        %p290 = scmp.lt.s32.totalorder %s285, 1
        %s291 = scalar_select %p290, %s285, 1
        %s292 = smul.addr %s289, 2
        %s293 = sadd.s32 %s291, %s292
        %s294 = smul.addr %s287, 16
        %s295 = sadd.s32 %s293, %s294
        %s296 = smul.addr %s295, 8
        %s297 = scalar_lea.vmem %s2, %s296
      $region47: #{tpu_custom_call.1} parent=42 // pred_fallthru
        _
    $region43: #{tpu_custom_call.1} parent=5 // pred_fallthru
      _
  $region6: #{tpu_custom_call.1} parent=0 // loop_footer
    %s12 = sadd.s32 1, %s8
  $region7: #{tpu_custom_call.1} parent=0 // loop_footer_branch
    %7 = sbr.rel target = $region3
  $region8: #{tpu_custom_call.1} parent=0 // loop_exit
    _

</llo_original>
